<compile_context>
chip_gen: v7x
topology: tpu7x:2x2x1
jax: 0.10.0
libtpu: 0.0.40
codegen_flags: <defaults>
</compile_context>

<pallas_src>
import jax
import jax.numpy as jnp
from jax.experimental import pallas as pl
from jax.experimental.pallas import tpu as pltpu

_LANES = 128
_MAX_BLOCK_ROWS = 1024  # (1024,128) f32 = 512 KiB/buffer; double-buffered still tiny vs VMEM


# ------------------------------------------------------------------ kernels --

def _times_identity_grad_kernel(r_ref, x_ref, o_ref, do_ref):
    # Fused Times(I(), r):  out = x * r,  dout = 1 * r
    r = r_ref[0, 0]
    o_ref[...] = x_ref[...] * r
    do_ref[...] = jnp.full(do_ref.shape, r, do_ref.dtype)


def _times_grad_kernel(r_ref, f_ref, df_ref, o_ref, do_ref):
    # Generic Times(f, r):  out = f * r,  dout = df * r
    r = r_ref[0, 0]
    o_ref[...] = f_ref[...] * r
    do_ref[...] = df_ref[...] * r


def _times_scale_kernel(r_ref, f_ref, o_ref):
    # grad=False path:  out = f * r
    o_ref[...] = f_ref[...] * r_ref[0, 0]


# ----------------------------------------------------------- call plumbing ---

def _pack(x):
    """Flatten to a lane-dense (rows, 128) f32 slab; rows a multiple of 8."""
    x = jnp.asarray(x, jnp.float32)
    n = x.size
    rows = -(-n // _LANES)
    block_rows = min(-(-rows // 8) * 8, _MAX_BLOCK_ROWS)
    rows_p = -(-rows // block_rows) * block_rows
    flat = x.reshape(-1)
    pad = rows_p * _LANES - n
    if pad:
        flat = jnp.pad(flat, (0, pad))
    return flat.reshape(rows_p, _LANES), n, block_rows


def _unpack(y2d, n, shape, dtype):
    return y2d.reshape(-1)[:n].reshape(shape).astype(dtype)


def _scalar_spec():
    # r travels on the scalar path: (1, 1) SMEM block, same block every step.
    return pl.BlockSpec((1, 1), lambda i: (0, 0), memory_space=pltpu.SMEM)


def _tile_spec(block_rows):
    return pl.BlockSpec((block_rows, _LANES), lambda i: (i, 0))


def _run(kernel, r_arr, operands, n_out, block_rows):
    rows = operands[0].shape[0]
    grid = (rows // block_rows,)
    tile = _tile_spec(block_rows)
    out_shape = tuple(
        jax.ShapeDtypeStruct(operands[0].shape, jnp.float32) for _ in range(n_out)
    )
    out_specs = tuple(tile for _ in range(n_out))
    if n_out == 1:
        out_shape, out_specs = out_shape[0], out_specs[0]
    return pl.pallas_call(
        kernel,
        out_shape=out_shape,
        grid=grid,
        in_specs=[_scalar_spec()] + [tile] * len(operands),
        out_specs=out_specs,
        compiler_params=pltpu.CompilerParams(dimension_semantics=("parallel",)),
    )(r_arr, *operands)


# ------------------------------------------------------------------ modules --

class IPallas:
    """Identity Func: forward(x) = (x, ones_like(x))."""

    def __call__(self, x, grad=True):
        if grad:
            return x, jnp.ones_like(x)
        return x


class SquareJax:
    """Small non-identity inner Func (f = x**2) to exercise the generic path."""

    def __call__(self, x, grad=True):
        if grad:
            return x * x, 2.0 * x
        return x * x


class TimesPallas:
    """JAX/Pallas port of theforce `Times` (func * number)."""

    def __init__(self, f, r):
        self.f = f
        self.r = float(r)

    def __call__(self, x, grad=True):
        r_arr = jnp.full((1, 1), self.r, dtype=jnp.float32)
        out_dtype = jnp.asarray(x).dtype

        if isinstance(self.f, IPallas):
            # Fused fast path: identity inner func handled inside the kernel,
            # so ones_like(x) is never materialized or DMA'd.
            x2d, n, br = _pack(x)
            if grad:
                o2d, g2d = _run(_times_identity_grad_kernel, r_arr, (x2d,), 2, br)
                return (_unpack(o2d, n, x.shape, out_dtype),
                        _unpack(g2d, n, x.shape, out_dtype))
            o2d = _run(_times_scale_kernel, r_arr, (x2d,), 1, br)
            return _unpack(o2d, n, x.shape, out_dtype)

        # Generic composition path: evaluate inner func, scale value (and
        # gradient) by r in a single fused pallas_call.
        if grad:
            fval, dfval = self.f(x, grad=True)
            f2d, n, br = _pack(fval)
            d2d, _, _ = _pack(dfval)
            o2d, g2d = _run(_times_grad_kernel, r_arr, (f2d, d2d), 2, br)
            return (_unpack(o2d, n, fval.shape, out_dtype),
                    _unpack(g2d, n, dfval.shape, out_dtype))
        fval = self.f(x, grad=False)
        f2d, n, br = _pack(fval)
        o2d = _run(_times_scale_kernel, r_arr, (f2d,), 1, br)
        return _unpack(o2d, n, fval.shape, out_dtype)


if __name__ == "__main__":
    key = jax.random.PRNGKey(0)
    x = jax.random.normal(key, (2, 4, 16, 16), dtype=jnp.float32)

    # Canonical usage: Times(I(), r)  ==  identity(x) * r
    r = 2.5
    mod = TimesPallas(IPallas(), r)

    val, dval = mod(x, grad=True)
    jax.block_until_ready((val, dval))
    assert val.shape == x.shape and dval.shape == x.shape
    assert val.dtype == x.dtype and dval.dtype == x.dtype
    assert jnp.allclose(val, x * r, atol=1e-6), "value mismatch"
    assert jnp.allclose(dval, jnp.full_like(x, r), atol=1e-6), "grad mismatch"

    val_ng = jax.block_until_ready(mod(x, grad=False))
    assert jnp.allclose(val_ng, x * r, atol=1e-6)

    # Generic composition: Times(f, r) with a non-identity inner func.
    mod2 = TimesPallas(SquareJax(), -0.75)
    v2, d2 = mod2(x, grad=True)
    jax.block_until_ready((v2, d2))
    assert jnp.allclose(v2, (x * x) * -0.75, atol=1e-5)
    assert jnp.allclose(d2, (2.0 * x) * -0.75, atol=1e-5)

    # Odd-sized input exercises the padding path.
    x3 = jax.random.normal(jax.random.PRNGKey(1), (3, 5, 7), dtype=jnp.float32)
    v3, d3 = mod(x3, grad=True)
    jax.block_until_ready((v3, d3))
    assert jnp.allclose(v3, x3 * r, atol=1e-6)
    assert jnp.allclose(d3, jnp.full_like(x3, r), atol=1e-6)

    print("KERNEL_OK")
</pallas_src>

<mosaic_0001>
module attributes {stable_mosaic.version = 11 : i64} {
  func.func @_times_identity_grad_kernel(%arg0: i32, %arg1: memref<1x1xf32, #tpu.memory_space<smem>>, %arg2: memref<16x128xf32, #tpu.memory_space<vmem>>, %arg3: memref<16x128xf32, #tpu.memory_space<vmem>>, %arg4: memref<16x128xf32, #tpu.memory_space<vmem>>) attributes {dimension_semantics = [#tpu.dimension_semantics<parallel>], iteration_bounds = array<i64: 1>, scalar_prefetch = 0 : i64, scratch_operands = 0 : i64, tpu.core_type = #tpu.core_type<tc>, window_params = [{transform_indices = @transform_0, window_bounds = array<i64: 1, 1>}, {transform_indices = @transform_1, window_bounds = array<i64: 16, 128>}, {transform_indices = @transform_2, window_bounds = array<i64: 16, 128>}, {transform_indices = @transform_3, window_bounds = array<i64: 16, 128>}]} {
    %c0 = arith.constant 0 : index
    %c0_0 = arith.constant 0 : index
    %0 = memref.load %arg1[%c0, %c0_0] : memref<1x1xf32, #tpu.memory_space<smem>>
    %c0_1 = arith.constant 0 : index
    %c0_2 = arith.constant 0 : index
    %1 = vector.load %arg2[%c0_1, %c0_2] : memref<16x128xf32, #tpu.memory_space<vmem>>, vector<16x128xf32>
    %2 = vector.broadcast %0 : f32 to vector<16x128xf32>
    %3 = arith.mulf %1, %2 : vector<16x128xf32>
    %c0_3 = arith.constant 0 : index
    %c0_4 = arith.constant 0 : index
    %4 = vector.load %arg3[%c0_3, %c0_4] : memref<16x128xf32, #tpu.memory_space<vmem>>, vector<16x128xf32>
    tpu.vector_store %arg3[%c0_3, %c0_4], %3 {strides = array<i32>} : memref<16x128xf32, #tpu.memory_space<vmem>>, vector<16x128xf32>,
    %5 = vector.broadcast %0 : f32 to vector<16x128xf32>
    %c0_5 = arith.constant 0 : index
    %c0_6 = arith.constant 0 : index
    %6 = vector.load %arg4[%c0_5, %c0_6] : memref<16x128xf32, #tpu.memory_space<vmem>>, vector<16x128xf32>
    tpu.vector_store %arg4[%c0_5, %c0_6], %5 {strides = array<i32>} : memref<16x128xf32, #tpu.memory_space<vmem>>, vector<16x128xf32>,
    return
  }
  func.func @transform_0(%arg0: i32) -> (i32, i32) {
    %c0_i32 = arith.constant 0 : i32
    %c0_i32_0 = arith.constant 0 : i32
    %c0_i32_1 = arith.constant 0 : i32
    return %c0_i32, %c0_i32_0 : i32, i32
  }
  func.func @transform_1(%arg0: i32) -> (i32, i32) {
    %c0_i32 = arith.constant 0 : i32
    %c0_i32_0 = arith.constant 0 : i32
    return %arg0, %c0_i32 : i32, i32
  }
  func.func @transform_2(%arg0: i32) -> (i32, i32) {
    %c0_i32 = arith.constant 0 : i32
    %c0_i32_0 = arith.constant 0 : i32
    return %arg0, %c0_i32 : i32, i32
  }
  func.func @transform_3(%arg0: i32) -> (i32, i32) {
    %c0_i32 = arith.constant 0 : i32
    %c0_i32_0 = arith.constant 0 : i32
    return %arg0, %c0_i32 : i32, i32
  }
}

</mosaic_0001>

<llo_original>
// kernel: tpu_custom_call.1
$region0: #{tpu_custom_call.1}
  #allocation0 [shape = 'u32[]', space=smem, size = 0x4, offset = 0x4, fixed_abs, tag = 'smem constant byte address 0x4 - core index']
  #allocation1 [shape = 'u32[144,128]{1,0:T(1,128)}', space=vmem, size = 0x12000, scoped, tag = 'internal scratch']
  #allocation2 [shape = 'f32[1,1]{1,0:T(1,128)S(6)}', space=smem, size = 0x200, scoped, tag = 'scoped memory for tpu_custom_call.1']
  %s0 = inlined_call_operand.<no memory space> [shape: f32[1,1], index: 0, kind: input, shape index: {}]
  %s1 = inlined_call_operand.hbm [shape: f32[16,128], index: 1, kind: input, shape index: {}]
  %s2 = inlined_call_operand.hbm [shape: f32[16,128], index: 2, kind: output, shape index: {0}]
  %s3 = inlined_call_operand.hbm [shape: f32[16,128], index: 3, kind: output, shape index: {1}]
  %4 = xla_tuple %s2, %s3
  %s5 = sld [smem:[#allocation0]]
  $region30: #{tpu_custom_call.1} parent=0
    _
  %s7 = ssub.s32 1, %s5
  %s8 = scalar_select 0, %s7, %s5
  %9 = sst [smem:[#allocation2]] %s0
  $region1: #{tpu_custom_call.1} parent=0
    #allocation3 [shape = 'u8[8192]{0}', space=vmem, size = 0x2000, scoped, tag = 'input window, operand 1, single buffered']
    #allocation4 [shape = 's32[1]{0}', space=sflag, size = 0x4, scoped, tag = 'scoped memory for tpu_custom_call.1']
    #allocation5 [shape = 's32[1]{0}', space=sflag, size = 0x4, scoped, tag = 'scoped memory for tpu_custom_call.1']
    #allocation6 [shape = 'u8[8192]{0}', space=vmem, size = 0x2000, scoped, tag = 'output window, operand 0, single buffered']
    #allocation7 [shape = 'u8[8192]{0}', space=vmem, size = 0x2000, scoped, tag = 'output window, operand 1, single buffered']
    #allocation8 [shape = 's32[1]{0}', space=sflag, size = 0x4, scoped, tag = 'scoped memory for tpu_custom_call.1']
    %10 = vsyncpa [#allocation4], 0
    %11 = vsyncpa [#allocation5], 0
    %12 = vsyncpa [#allocation8], 0
    // Predicated region
    $region2: #{tpu_custom_call.1} parent=1 // pred_check
      _
    $region3: #{tpu_custom_call.1} parent=1 // pred_check_branch
      %14 = sbr.rel (0) target = $region5
    $region4: #{tpu_custom_call.1} parent=1 // pred_region
      _
    $region5: #{tpu_custom_call.1} parent=1 // pred_fallthru
      _
    // Predicated region
    $region6: #{tpu_custom_call.1} parent=1 // pred_check
      _
    $region7: #{tpu_custom_call.1} parent=1 // pred_check_branch
      %16 = sbr.rel (0) target = $region9
    $region8: #{tpu_custom_call.1} parent=1 // pred_region
      %s18 = ssub.s32 256, 256
      %19 = vsyncadd [#allocation4], %s18
      %s20 = sshll.u32 [#allocation3], 4
      %s21 = int_to_ptr.vmem [resolvable:$true] %s20
      %26 = dma.hbm_to_vmem [thread:$0]  %s1, 256, %s21, [#allocation4], 128, 128, 8
    $region9: #{tpu_custom_call.1} parent=1 // pred_fallthru
      _
    // Predicated region
    $region10: #{tpu_custom_call.1} parent=1 // pred_check
      _
    $region11: #{tpu_custom_call.1} parent=1 // pred_check_branch
      %28 = sbr.rel (0) target = $region13
    $region12: #{tpu_custom_call.1} parent=1 // pred_region
      %29 = dma.done [#allocation4], 256
    $region13: #{tpu_custom_call.1} parent=1 // pred_fallthru
      _
    %s30 = sld [smem:[#allocation2]]
    %v31 = vld [vmem:[#allocation3] sm:$0xff]
    %v32 = vld [vmem:[#allocation3 + $0x8] sm:$0xff]
    %v33 = vstv %s30
    %v34 = vmul.f32 %v31, %v33
    %v35 = vmul.f32 %v32, %v33
    %36 = vst [vmem:[#allocation6] sm:$0xff] %v34
    %37 = vst [vmem:[#allocation6 + $0x8] sm:$0xff] %v35
    %38 = vst [vmem:[#allocation7] sm:$0xff] %v33
    %39 = vst [vmem:[#allocation7 + $0x8] sm:$0xff] %v33
    // Predicated region
    $region14: #{tpu_custom_call.1} parent=1 // pred_check
      _
    $region15: #{tpu_custom_call.1} parent=1 // pred_check_branch
      %41 = sbr.rel (0) target = $region17
    $region16: #{tpu_custom_call.1} parent=1 // pred_region
      %s43 = ssub.s32 256, 256
      %44 = vsyncadd [#allocation5], %s43
      %s45 = sshll.u32 [#allocation6], 4
      %s46 = int_to_ptr.vmem [resolvable:$true] %s45
      %51 = dma.vmem_to_hbm [thread:$0]  %s46, 256, %s2, [#allocation5], 128, 128, 8
    $region17: #{tpu_custom_call.1} parent=1 // pred_fallthru
      _
    // Predicated region
    $region18: #{tpu_custom_call.1} parent=1 // pred_check
      _
    $region19: #{tpu_custom_call.1} parent=1 // pred_check_branch
      %53 = sbr.rel (0) target = $region21
    $region20: #{tpu_custom_call.1} parent=1 // pred_region
      %s55 = ssub.s32 256, 256
      %56 = vsyncadd [#allocation8], %s55
      %s57 = sshll.u32 [#allocation7], 4
      %s58 = int_to_ptr.vmem [resolvable:$true] %s57
      %63 = dma.vmem_to_hbm [thread:$0]  %s58, 256, %s3, [#allocation8], 128, 128, 8
    $region21: #{tpu_custom_call.1} parent=1 // pred_fallthru
      _
    // Predicated region
    $region22: #{tpu_custom_call.1} parent=1 // pred_check
      _
    $region23: #{tpu_custom_call.1} parent=1 // pred_check_branch
      %65 = sbr.rel (0) target = $region25
    $region24: #{tpu_custom_call.1} parent=1 // pred_region
      %66 = dma.done [#allocation5], 256
    $region25: #{tpu_custom_call.1} parent=1 // pred_fallthru
      _
    // Predicated region
    $region26: #{tpu_custom_call.1} parent=1 // pred_check
      _
    $region27: #{tpu_custom_call.1} parent=1 // pred_check_branch
      %68 = sbr.rel (0) target = $region29
    $region28: #{tpu_custom_call.1} parent=1 // pred_region
      %69 = dma.done [#allocation8], 256
    $region29: #{tpu_custom_call.1} parent=1 // pred_fallthru
      _
    %70 = vsyncpa [#allocation4], 1
    %71 = vsyncpa [#allocation5], 1
    %72 = vsyncpa [#allocation8], 1

</llo_original>
